<compile_context>
chip_gen: v7x
topology: tpu7x:2x2x1
jax: 0.10.0
libtpu: 0.0.40
codegen_flags: <defaults>
</compile_context>

<pallas_src>
import jax
import jax.numpy as jnp
from jax.experimental import pallas as pl
from jax.experimental.pallas import tpu as pltpu


# ----------------------------- Pallas kernel -------------------------------

def _proj_kernel(p_ref, w_ref, b_ref, o_ref):
    # p_ref: (1, K, TS)  bf16 channel-major im2col tile (one image)
    # w_ref: (E, K)      bf16 projection weight (resident across the grid)
    # b_ref: (E, 1)      f32 bias (resident)
    # o_ref: (1, E, TS)  output tile
    acc = jnp.dot(w_ref[...], p_ref[0],
                  preferred_element_type=jnp.float32)       # (E, TS) on MXU
    o_ref[...] = (acc + b_ref[...])[None].astype(o_ref.dtype)


def _pick_spatial_tile(S, max_tile=4096):
    """Full extent if small; else the largest lane-aligned (multiple-of-128)
    divisor of S that is <= max_tile."""
    if S <= max_tile:
        return S
    t = (max_tile // 128) * 128
    while t >= 128:
        if S % t == 0:
            return t
        t -= 128
    # TODO(synk): pad the spatial dim for huge images whose Ho*Wo has no
    # 128-aligned divisor; a full-extent block may be VMEM-heavy in that case.
    return S


def _proj_matmul(patches, w_mat, bias, out_dtype):
    """(B, K, S) bf16  x  (E, K) bf16  ->  (B, E, S) out_dtype, bias fused."""
    B, K, S = patches.shape
    E = w_mat.shape[0]
    TS = _pick_spatial_tile(S)

    bias2d = bias.astype(jnp.float32).reshape(E, 1)

    return pl.pallas_call(
        _proj_kernel,
        out_shape=jax.ShapeDtypeStruct((B, E, S), out_dtype),
        grid=(B, S // TS),
        in_specs=[
            pl.BlockSpec((1, K, TS), lambda b, s: (b, 0, s)),   # patch tile
            pl.BlockSpec((E, K), lambda b, s: (0, 0)),          # weight
            pl.BlockSpec((E, 1), lambda b, s: (0, 0)),          # bias
        ],
        out_specs=pl.BlockSpec((1, E, TS), lambda b, s: (b, 0, s)),
        compiler_params=pltpu.CompilerParams(
            dimension_semantics=("parallel", "parallel"),
            vmem_limit_bytes=32 * 1024 * 1024),
    )(patches, w_mat, bias2d)


# ------------------------------ PatchEmbed ---------------------------------

def patch_embed_forward(x, weight, bias, patch_size, kernel_size=None,
                        out_dtype=jnp.bfloat16):
    """x: (B, C, H, W).  weight: (E, C, k, k).  bias: (E,).
    Returns (B, E, Ho, Wo), matching nn.Conv2d(..., stride=patch_size,
    padding=(k - patch_size + 1)//2, padding_mode='reflect').
    Matmul runs with bf16 inputs / f32 accumulation; output dtype is
    `out_dtype` (bf16 by default per the perf review; use jnp.float32 for a
    dtype-exact match with the PyTorch module)."""
    if kernel_size is None:
        kernel_size = patch_size
    B, C, H, W = x.shape
    E = weight.shape[0]
    k, p = kernel_size, patch_size
    pad = (k - p + 1) // 2
    K = C * k * k

    # Cast fuses into the im2col copy below -> no separate HBM cast/pad pass.
    x = x.astype(jnp.bfloat16)
    if pad > 0:
        x = jnp.pad(x, ((0, 0), (0, 0), (pad, pad), (pad, pad)), mode="reflect")
    Hp, Wp = x.shape[2], x.shape[3]
    Ho = (Hp - k) // p + 1
    Wo = (Wp - k) // p + 1

    if k == p and pad == 0 and Hp == Ho * p and Wp == Wo * p:
        # Non-overlapping patches: channel-major im2col is one
        # reshape/transpose pass; feature order (C, kh, kw) matches
        # weight.reshape(E, C*k*k).
        patches = (x.reshape(B, C, Ho, p, Wo, p)
                   .transpose(0, 1, 3, 5, 2, 4)
                   .reshape(B, K, Ho * Wo))
    else:
        # Overlapping / reflect-padded case: strided-slice im2col, already in
        # channel-major (B, K, Ho*Wo) layout -> no extra transpose pass.
        # TODO(synk): fuse this gather into the kernel as a (kh,kw) grid
        # reduction with a VMEM accumulator to avoid materializing the
        # ~(k/p)^2x patch matrix in HBM.
        cols = []
        for i in range(k):
            for j in range(k):
                cols.append(x[:, :, i::p, j::p][:, :, :Ho, :Wo])
        patches = jnp.stack(cols, axis=2).reshape(B, K, Ho * Wo)

    w_mat = weight.reshape(E, K).astype(jnp.bfloat16)

    out = _proj_matmul(patches, w_mat, bias, out_dtype)      # (B, E, Ho*Wo)
    return out.reshape(B, E, Ho, Wo)                         # free reshape


# -------------------------------- Driver -----------------------------------

def _reference_conv(x, weight, bias, patch_size, kernel_size):
    """Plain XLA reference (reflect pad + VALID conv) for verification."""
    k, p = kernel_size, patch_size
    pad = (k - p + 1) // 2
    if pad > 0:
        x = jnp.pad(x, ((0, 0), (0, 0), (pad, pad), (pad, pad)), mode="reflect")
    y = jax.lax.conv_general_dilated(
        x, weight, window_strides=(p, p), padding="VALID",
        dimension_numbers=("NCHW", "OIHW", "NCHW"))
    return y + bias.reshape(1, -1, 1, 1)


if __name__ == "__main__":
    key = jax.random.PRNGKey(0)

    # Small config consistent with the module: patch_size=4, kernel_size=None->4
    B, C, H, W = 2, 4, 16, 16
    E, P, KS = 32, 4, None

    kx, kw, kb = jax.random.split(key, 3)
    x = jax.random.normal(kx, (B, C, H, W), dtype=jnp.float32)
    k_eff = P if KS is None else KS
    fan_in = C * k_eff * k_eff
    weight = jax.random.uniform(kw, (E, C, k_eff, k_eff), jnp.float32,
                                minval=-1.0, maxval=1.0) / jnp.sqrt(fan_in)
    bias = jax.random.uniform(kb, (E,), jnp.float32, minval=-0.1, maxval=0.1)

    y = patch_embed_forward(x, weight, bias, patch_size=P, kernel_size=KS)
    y = jax.block_until_ready(y)

    y_ref = _reference_conv(x, weight, bias, P, k_eff)
    assert y.shape == y_ref.shape == (B, E, H // P, W // P), (y.shape, y_ref.shape)
    # bf16 matmul inputs/output, f32 accumulation -> comfortably within 2e-2.
    assert jnp.allclose(y.astype(jnp.float32), y_ref, atol=2e-2, rtol=2e-2), \
        "mismatch vs XLA conv reference"

    # Also exercise the reflect-padding / overlapping-patch path (k != p).
    KS2 = 7
    w2 = jax.random.uniform(kw, (E, C, KS2, KS2), jnp.float32,
                            minval=-1.0, maxval=1.0) / jnp.sqrt(C * KS2 * KS2)
    y2 = jax.block_until_ready(
        patch_embed_forward(x, w2, bias, patch_size=P, kernel_size=KS2))
    y2_ref = _reference_conv(x, w2, bias, P, KS2)
    assert y2.shape == y2_ref.shape
    assert jnp.allclose(y2.astype(jnp.float32), y2_ref, atol=2e-2, rtol=2e-2), \
        "reflect-pad path mismatch"

    print("KERNEL_OK")
</pallas_src>

<mosaic_0001>
module attributes {stable_mosaic.version = 11 : i64} {
  func.func @_proj_kernel(%arg0: i32, %arg1: i32, %arg2: memref<1x64x16xbf16, #tpu.memory_space<vmem>>, %arg3: memref<32x64xbf16, #tpu.memory_space<vmem>>, %arg4: memref<32x1xf32, #tpu.memory_space<vmem>>, %arg5: memref<1x32x16xbf16, #tpu.memory_space<vmem>>) attributes {dimension_semantics = [#tpu.dimension_semantics<parallel>, #tpu.dimension_semantics<parallel>], iteration_bounds = array<i64: 2, 1>, scalar_prefetch = 0 : i64, scratch_operands = 0 : i64, tpu.core_type = #tpu.core_type<tc>, window_params = [{transform_indices = @transform_0, window_bounds = array<i64: 1, 64, 16>}, {pipeline_mode = #tpu.pipeline_mode<synchronous>, transform_indices = @transform_1, window_bounds = array<i64: 32, 64>}, {pipeline_mode = #tpu.pipeline_mode<synchronous>, transform_indices = @transform_2, window_bounds = array<i64: 32, 1>}, {transform_indices = @transform_3, window_bounds = array<i64: 1, 32, 16>}]} {
    %c0 = arith.constant 0 : index
    %c0_0 = arith.constant 0 : index
    %0 = vector.load %arg3[%c0, %c0_0] : memref<32x64xbf16, #tpu.memory_space<vmem>>, vector<32x64xbf16>
    %c0_1 = arith.constant 0 : index
    %c0_2 = arith.constant 0 : index
    %c0_3 = arith.constant 0 : index
    %1 = vector.load %arg2[%c0_1, %c0_2, %c0_3] : memref<1x64x16xbf16, #tpu.memory_space<vmem>>, vector<1x64x16xbf16>
    %2 = vector.shape_cast %1 : vector<1x64x16xbf16> to vector<64x16xbf16>
    %cst = arith.constant dense<0.000000e+00> : vector<32x16xf32>
    %3 = tpu.matmul %0, %2, %cst {dimension_numbers = #tpu.dot_dimension_numbers<[1], [0], [0], [1], [0, 0, 1, 1], [], []>} : vector<32x64xbf16>, vector<64x16xbf16>, vector<32x16xf32> -> vector<32x16xf32>
    %c0_4 = arith.constant 0 : index
    %c0_5 = arith.constant 0 : index
    %4 = vector.load %arg4[%c0_4, %c0_5] : memref<32x1xf32, #tpu.memory_space<vmem>>, vector<32x1xf32>
    %5 = vector.broadcast %4 : vector<32x1xf32> to vector<32x16xf32>
    %6 = arith.addf %3, %5 : vector<32x16xf32>
    %7 = vector.shape_cast %6 : vector<32x16xf32> to vector<1x32x16xf32>
    %8 = arith.truncf %7 : vector<1x32x16xf32> to vector<1x32x16xbf16>
    %c0_6 = arith.constant 0 : index
    %c0_7 = arith.constant 0 : index
    %c0_8 = arith.constant 0 : index
    %9 = vector.load %arg5[%c0_6, %c0_7, %c0_8] : memref<1x32x16xbf16, #tpu.memory_space<vmem>>, vector<1x32x16xbf16>
    tpu.vector_store %arg5[%c0_6, %c0_7, %c0_8], %8 {strides = array<i32>} : memref<1x32x16xbf16, #tpu.memory_space<vmem>>, vector<1x32x16xbf16>,
    return
  }
  func.func @transform_0(%arg0: i32, %arg1: i32) -> (i32, i32, i32) {
    %c0_i32 = arith.constant 0 : i32
    %c0_i32_0 = arith.constant 0 : i32
    return %arg0, %c0_i32, %arg1 : i32, i32, i32
  }
  func.func @transform_1(%arg0: i32, %arg1: i32) -> (i32, i32) {
    %c0_i32 = arith.constant 0 : i32
    %c0_i32_0 = arith.constant 0 : i32
    %c0_i32_1 = arith.constant 0 : i32
    return %c0_i32, %c0_i32_0 : i32, i32
  }
  func.func @transform_2(%arg0: i32, %arg1: i32) -> (i32, i32) {
    %c0_i32 = arith.constant 0 : i32
    %c0_i32_0 = arith.constant 0 : i32
    %c0_i32_1 = arith.constant 0 : i32
    return %c0_i32, %c0_i32_0 : i32, i32
  }
  func.func @transform_3(%arg0: i32, %arg1: i32) -> (i32, i32, i32) {
    %c0_i32 = arith.constant 0 : i32
    %c0_i32_0 = arith.constant 0 : i32
    return %arg0, %c0_i32, %arg1 : i32, i32, i32
  }
}

</mosaic_0001>

<llo_original>
// kernel: tpu_custom_call.1
$region0: #{tpu_custom_call.1}
  #allocation0 [shape = 'u32[]', space=smem, size = 0x4, offset = 0x4, fixed_abs, tag = 'smem constant byte address 0x4 - core index']
  #allocation1 [shape = 'u32[144,128]{1,0:T(1,128)}', space=vmem, size = 0x12000, scoped, tag = 'internal scratch']
  %s0 = inlined_call_operand.vmem [shape: bf16[2,64,16], index: 0, kind: input, shape index: {}]
  %s1 = inlined_call_operand.vmem [shape: bf16[32,64], index: 1, kind: input, shape index: {}]
  %s2 = inlined_call_operand.vmem [shape: f32[32,1], index: 2, kind: input, shape index: {}]
  %s3 = inlined_call_operand.vmem [shape: bf16[2,32,16], index: 3, kind: output, shape index: {}]
  %s4 = sld [smem:[#allocation0]]
  $region45: #{tpu_custom_call.1} parent=0
    _
  %s6 = ssub.s32 1, %s4
  %s7 = scalar_select 0, %s6, %s4
  loop: start=0, step=1, limit=4
  $region2: #{tpu_custom_call.1} parent=0 // loop_pre_header
    _
  $region3: #{tpu_custom_call.1} parent=0 // loop_header
    %s9 = sphi 0, %s13
    %p10 = scmp.ge.s32.totalorder %s9, 4
    %s16 = sphi 0, %s28
    %s17 = sphi 0, %s24
    %s18 = sphi 0, %s16
    %s19 = sphi 0, %s17
    %s20 = sphi 0, %s18
    %s21 = sphi 0, %s19
    %s33 = sphi 0, %s35
    %s36 = sphi 0, %s33
    %s37 = sphi 0, %s36
    %s53 = sphi 0, %s37
    %s57 = sphi 0, %s57
    %s59 = sphi 0, %s57
    %s60 = sphi 0, %s59
    %s74 = sphi 0, %s60
    %s78 = sphi 0, %s78
    %s80 = sphi 0, %s78
    %s81 = sphi 0, %s80
    %s95 = sphi 0, %s81
    %s103 = sphi 0, %s105
    %s106 = sphi 0, %s103
    %s107 = sphi 0, %s106
    %s123 = sphi 0, %s107
  $region4: #{tpu_custom_call.1} parent=0 // loop_header_branch
    %12 = sbr.rel (%p10) target = $region8
  $region5: #{tpu_custom_call.1} parent=0 // loop_body
    %s14 = ssub.s32 %s9, 1
    %s15 = ssub.s32 %s9, 2
    %s22 = sadd.s32 1, %s17
    %p23 = scmp.ge.s32.totalorder %s22, 1
    %s24 = scalar_select %p23, 0, %s22
    %s25 = sadd.s32 1, %s16
    %s26 = scalar_select %p23, %s25, %s16
    %p27 = scmp.ge.s32.totalorder %s26, 2
    %s28 = scalar_select %p27, 0, %s26
    %s29 = ssub.s32 %s16, %s28
    %s30 = ssub.s32 %s17, %s24
    %s31 = sor.u32 %s29, %s30
    %p32 = scmp.eq.s32.totalorder %s31, 0
    %s34 = sadd.s32 %s33, 1
    %s35 = scalar_select %p32, %s33, %s34
    %p38 = pneg %p32
    %p39 = scmp.eq.s32.totalorder %s9, 1
    %p40 = por %p38, %p39
    %p41 = scmp.ne.s32.totalorder %s33, %s36
    %p42 = scmp.eq.s32.totalorder %s9, 0
    %p43 = por %p41, %p42
    %p44 = scmp.ne.s32.totalorder %s33, %s36
    %p45 = scmp.eq.s32.totalorder %s14, 1
    %p46 = por %p44, %p45
    %p47 = scmp.ne.s32.totalorder %s36, %s37
    %p48 = scmp.eq.s32.totalorder %s14, 0
    %p49 = por %p47, %p48
    %p50 = scmp.ne.s32.totalorder %s36, %s37
    %p51 = scmp.eq.s32.totalorder %s15, 1
    %p52 = por %p50, %p51
    %p54 = scmp.ne.s32.totalorder %s37, %s53
    %p55 = scmp.eq.s32.totalorder %s15, 0
    %p56 = por %p54, %p55
    %s58 = sadd.s32 %s57, 1
    %p61 = scmp.eq.s32.totalorder %s9, 1
    %p62 = scmp.ne.s32.totalorder %s57, %s59
    %p63 = scmp.eq.s32.totalorder %s9, 0
    %p64 = por %p62, %p63
    %p65 = scmp.ne.s32.totalorder %s57, %s59
    %p66 = scmp.eq.s32.totalorder %s14, 1
    %p67 = por %p65, %p66
    %p68 = scmp.ne.s32.totalorder %s59, %s60
    %p69 = scmp.eq.s32.totalorder %s14, 0
    %p70 = por %p68, %p69
    %p71 = scmp.ne.s32.totalorder %s59, %s60
    %p72 = scmp.eq.s32.totalorder %s15, 1
    %p73 = por %p71, %p72
    %p75 = scmp.ne.s32.totalorder %s60, %s74
    %p76 = scmp.eq.s32.totalorder %s15, 0
    %p77 = por %p75, %p76
    %s79 = sadd.s32 %s78, 1
    %p82 = scmp.eq.s32.totalorder %s9, 1
    %p83 = scmp.ne.s32.totalorder %s78, %s80
    %p84 = scmp.eq.s32.totalorder %s9, 0
    %p85 = por %p83, %p84
    %p86 = scmp.ne.s32.totalorder %s78, %s80
    %p87 = scmp.eq.s32.totalorder %s14, 1
    %p88 = por %p86, %p87
    %p89 = scmp.ne.s32.totalorder %s80, %s81
    %p90 = scmp.eq.s32.totalorder %s14, 0
    %p91 = por %p89, %p90
    %p92 = scmp.ne.s32.totalorder %s80, %s81
    %p93 = scmp.eq.s32.totalorder %s15, 1
    %p94 = por %p92, %p93
    %p96 = scmp.ne.s32.totalorder %s81, %s95
    %p97 = scmp.eq.s32.totalorder %s15, 0
    %p98 = por %p96, %p97
    %s99 = ssub.s32 %s16, %s28
    %s100 = ssub.s32 %s17, %s24
    %s101 = sor.u32 %s99, %s100
    %p102 = scmp.eq.s32.totalorder %s101, 0
    %s104 = sadd.s32 %s103, 1
    %s105 = scalar_select %p102, %s103, %s104
    %p108 = pneg %p102
    %p109 = scmp.eq.s32.totalorder %s9, 1
    %p110 = por %p108, %p109
    %p111 = scmp.ne.s32.totalorder %s103, %s106
    %p112 = scmp.eq.s32.totalorder %s9, 0
    %p113 = por %p111, %p112
    %p114 = scmp.ne.s32.totalorder %s103, %s106
    %p115 = scmp.eq.s32.totalorder %s14, 1
    %p116 = por %p114, %p115
    %p117 = scmp.ne.s32.totalorder %s106, %s107
    %p118 = scmp.eq.s32.totalorder %s14, 0
    %p119 = por %p117, %p118
    %p120 = scmp.ne.s32.totalorder %s106, %s107
    %p121 = scmp.eq.s32.totalorder %s15, 1
    %p122 = por %p120, %p121
    %p124 = scmp.ne.s32.totalorder %s107, %s123
    %p125 = scmp.eq.s32.totalorder %s15, 0
    %p126 = por %p124, %p125
    %p127 = scmp.le.s32.totalorder 1, %s9
    %p128 = scmp.lt.s32.totalorder %s9, 3
    %p129 = pnand %p127, %p128
    %p130 = pneg %p129
    // Predicated region
    $region9: #{tpu_custom_call.1} parent=5 // pred_check
      _
    $region10: #{tpu_custom_call.1} parent=5 // pred_check_branch
      %132 = sbr.rel (%p129) target = $region12
    $region11: #{tpu_custom_call.1} parent=5 // pred_region
      %s133 = ssub.s32 %s9, 1
      // Predicated region
      $region13: #{tpu_custom_call.1} parent=11 // pred_check
        %p134 = pneg %p70
      $region14: #{tpu_custom_call.1} parent=11 // pred_check_branch
        %136 = sbr.rel (%p134) target = $region16
      $region15: #{tpu_custom_call.1} parent=11 // pred_region
        _
      $region16: #{tpu_custom_call.1} parent=11 // pred_fallthru
        _
      // Predicated region
      $region17: #{tpu_custom_call.1} parent=11 // pred_check
        %p137 = pneg %p91
      $region18: #{tpu_custom_call.1} parent=11 // pred_check_branch
        %139 = sbr.rel (%p137) target = $region20
      $region19: #{tpu_custom_call.1} parent=11 // pred_region
        _
      $region20: #{tpu_custom_call.1} parent=11 // pred_fallthru
        _
    $region12: #{tpu_custom_call.1} parent=5 // pred_fallthru
      _
    %p140 = scmp.lt.s32.totalorder %s9, 2
    // Predicated region
    $region21: #{tpu_custom_call.1} parent=5 // pred_check
      %p141 = pneg %p140
    $region22: #{tpu_custom_call.1} parent=5 // pred_check_branch
      %143 = sbr.rel (%p141) target = $region24
    $region23: #{tpu_custom_call.1} parent=5 // pred_region
      // Predicated region
      $region25: #{tpu_custom_call.1} parent=23 // pred_check
        %p144 = pneg %p43
      $region26: #{tpu_custom_call.1} parent=23 // pred_check_branch
        %146 = sbr.rel (%p144) target = $region28
      $region27: #{tpu_custom_call.1} parent=23 // pred_region
        %p147 = scmp.lt.s32.totalorder %s16, 1
        %s148 = scalar_select %p147, %s16, 1
        %p149 = scmp.lt.s32.totalorder %s17, 0
        %s150 = scalar_select %p149, %s17, 0
        %s151 = smul.addr %s148, 8
        %s152 = sadd.s32 %s150, %s151
        %s153 = smul.addr %s152, 4
        %s154 = scalar_lea.vmem %s0, %s153
      $region28: #{tpu_custom_call.1} parent=23 // pred_fallthru
        _
    $region24: #{tpu_custom_call.1} parent=5 // pred_fallthru
      _
    %p155 = scmp.le.s32.totalorder 1, %s9
    %p156 = scmp.lt.s32.totalorder %s9, 3
    %p157 = pnand %p155, %p156
    %p158 = pneg %p157
    // Predicated region
    $region29: #{tpu_custom_call.1} parent=5 // pred_check
      _
    $region30: #{tpu_custom_call.1} parent=5 // pred_check_branch
      %160 = sbr.rel (%p157) target = $region32
    $region31: #{tpu_custom_call.1} parent=5 // pred_region
      %s161 = ssub.s32 %s9, 1
      %p162 = scmp.lt.s32.totalorder %s18, 1
      %s163 = scalar_select %p162, %s18, 1
      %p164 = scmp.lt.s32.totalorder %s19, 0
      %s165 = scalar_select %p164, %s19, 0
      %s166 = smul.addr %s163, 8
      %s167 = sadd.s32 %s165, %s166
      %s168 = smul.addr %s167, 4
      %s169 = scalar_lea.vmem %s0, %s168
      %p170 = pneg %p49
      %p171 = pneg %p46
      %p172 = pneg %p70
      %p173 = pneg %p67
      %p174 = pneg %p91
      %p175 = pneg %p88
      %p176 = pneg %p119
      %p177 = pneg %p116
      %p178 = scmp.lt.s32.totalorder %s18, 1
      %s179 = scalar_select %p178, %s18, 1
      %p180 = scmp.lt.s32.totalorder %s19, 0
      %s181 = scalar_select %p180, %s19, 0
      %s182 = smul.addr %s179, 4
      %s183 = sadd.s32 %s181, %s182
      %s184 = smul.addr %s183, 4
      %s185 = scalar_lea.vmem %s3, %s184
      %p186 = scmp.lt.s32.totalorder %s18, 1
      %s187 = scalar_select %p186, %s18, 1
      %p188 = scmp.lt.s32.totalorder %s19, 0
      %s189 = scalar_select %p188, %s19, 0
      %s190 = smul.addr %s187, 8
      %s191 = sadd.s32 %s189, %s190
      %s192 = smul.addr %s191, 4
      %s193 = scalar_lea.vmem %s0, %s192
      %p194 = scmp.lt.s32.totalorder %s18, 1
      %s195 = scalar_select %p194, %s18, 1
      %p196 = scmp.lt.s32.totalorder %s19, 0
      %s197 = scalar_select %p196, %s19, 0
      %s198 = smul.addr %s195, 4
      %s199 = sadd.s32 %s197, %s198
      %s200 = smul.addr %s199, 4
      %s201 = scalar_lea.vmem %s3, %s200
      %v203 = vld [vmem:[%s1] sm:$0xf]
      %v204 = vld [vmem:[%s1 + $0x4] sm:$0xf]
      %v205 = vld [vmem:[%s1 + $0x8] sm:$0xf]
      %v206 = vld [vmem:[%s1 + $0xc] sm:$0xf]
      %v207 = vld [vmem:[%s193] sm:$0xf]
      %v208 = vld [vmem:[%s193 + $0x4] sm:$0xf]
      %v209 = vld [vmem:[%s193 + $0x8] sm:$0xf]
      %v210 = vld [vmem:[%s193 + $0xc] sm:$0xf]
      %v211 = vld [vmem:[%s193 + $0x10] sm:$0xf]
      %v212 = vld [vmem:[%s193 + $0x14] sm:$0xf]
      %v213 = vld [vmem:[%s193 + $0x18] sm:$0xf]
      %v214 = vld [vmem:[%s193 + $0x1c] sm:$0xf]
      %v215 = vld [vmem:[%s2] sm:$0xff]
      %v216 = vld [vmem:[%s2 + $0x8] sm:$0xff]
      %v217 = vld [vmem:[%s2 + $0x10] sm:$0xff]
      %v218 = vld [vmem:[%s2 + $0x18] sm:$0xff]
      %220 = vset.pattern.permute.xlu0 0
      %221 = vperm.xlu0 %220, %v215
      %v222 = vpop.permute.xlu0 %221
      %225 = vset.pattern.permute.xlu0 0
      %226 = vperm.xlu0 %225, %v216
      %v227 = vpop.permute.xlu0 %226
      %230 = vset.pattern.permute.xlu0 0
      %231 = vperm.xlu0 %230, %v217
      %v232 = vpop.permute.xlu0 %231
      %235 = vset.pattern.permute.xlu0 0
      %236 = vperm.xlu0 %235, %v218
      %v237 = vpop.permute.xlu0 %236
      %v243 = vunpack.c.l.b16 %v203
      %v244 = vunpack.c.l.b16 %v204
      %v245 = vunpack.c.l.b16 %v205
      %v246 = vunpack.c.l.b16 %v206
      %v247 = vpack.c.b16 %v244, %v243
      %v248 = vpack.c.b16 %v246, %v245
      %v257 = vunpack.c.l.b16 %v207
      %v258 = vunpack.c.l.b16 %v208
      %v259 = vunpack.c.l.b16 %v209
      %v260 = vunpack.c.l.b16 %v210
      %v261 = vunpack.c.l.b16 %v211
      %v262 = vunpack.c.l.b16 %v212
      %v263 = vunpack.c.l.b16 %v213
      %v264 = vunpack.c.l.b16 %v214
      %v265 = vpack.c.b16 %v258, %v257
      %v266 = vpack.c.b16 %v260, %v259
      %v267 = vpack.c.b16 %v262, %v261
      %v268 = vpack.c.b16 %v264, %v263
      %vm273 = vcmask 523264
      %v275 = vsel %vm273, %v247, 0
      %v278 = vsel %vm273, %v248, 0
      %280 = vmatprep.subr.bf16.mxu0 0
      %281 = vmatpush1.bf16.msra.mxu0 %v265
      %282 = vmatprep.subr.bf16.mxu0 0
      %283 = vmatpush1.bf16.msra.mxu0 %v266
      %284 = vmatprep.subr.bf16.mxu0 0
      %285 = vmatpush1.bf16.msra.mxu0 %v267
      %286 = vmatprep.subr.bf16.mxu0 0
      %287 = vmatpush1.bf16.msra.mxu0 %v268
      %288 = vmatprep.subr.bf16.mxu0 0
      %289 = vmatpush1.bf16.msra.mxu0 0
      %290 = vmatprep.subr.bf16.mxu0 0
      %291 = vmatpush1.bf16.msra.mxu0 0
      %292 = vmatprep.subr.bf16.mxu0 0
      %293 = vmatpush1.bf16.msra.mxu0 0
      %294 = vmatprep.subr.bf16.mxu0 0
      %295 = vmatpush1.bf16.msra.mxu0 0
      %296 = vmatprep.subr.bf16.mxu0 0
      %297 = vmatpush1.bf16.msra.mxu0 0
      %298 = vmatprep.subr.bf16.mxu0 0
      %299 = vmatpush1.bf16.msra.mxu0 0
      %300 = vmatprep.subr.bf16.mxu0 0
      %301 = vmatpush1.bf16.msra.mxu0 0
      %302 = vmatprep.subr.bf16.mxu0 0
      %303 = vmatpush1.bf16.msra.mxu0 0
      %304 = vmatprep.subr.bf16.mxu0 0
      %305 = vmatpush1.bf16.msra.mxu0 0
      %306 = vmatprep.subr.bf16.mxu0 0
      %307 = vmatpush1.bf16.msra.mxu0 0
      %308 = vmatprep.subr.bf16.mxu0 0
      %309 = vmatpush1.bf16.msra.mxu0 0
      %310 = vmatprep.subr.bf16.mxu0 0
      %311 = vmatpush1.bf16.msra.mxu0 0
      %312 = vmatprep.mubr.bf16.mxu0 0
      %313 = vmatmul.mubr.bf16.gmra.mrb[0].mxu0 %v275
      %v314 = vpop.f32.mrb[0].mxu0
      %v315 = vadd.f32 %v222, %v314
      %v316 = vpop.f32.mrb[0].mxu0
      %v317 = vpop.f32.mrb[0].mxu0
      %v318 = vadd.f32 %v227, %v317
      %v319 = vpop.f32.mrb[0].mxu0
      %320 = vmatprep.mubr.bf16.mxu0 0
      %321 = vmatmul.mubr.bf16.gmra.mrb[0].mxu0 %v278
      %v322 = vpop.f32.mrb[0].mxu0
      %v323 = vadd.f32 %v232, %v322
      %v324 = vpop.f32.mrb[0].mxu0
      %v325 = vpop.f32.mrb[0].mxu0
      %v326 = vadd.f32 %v237, %v325
      %v327 = vpop.f32.mrb[0].mxu0
      %328 = vdwg.mxu0
      %v329 = vpack.c.bf16 %v318, %v315
      %v330 = vpack.c.bf16 %v326, %v323
      %v333 = vunpack.c.l.b16 %v329
      %v334 = vunpack.c.h.b16 %v329
      %v335 = vunpack.c.l.b16 %v330
      %v336 = vunpack.c.h.b16 %v330
      %v337 = vpack.c.b16 %v333, %v333
      %v338 = vpack.c.b16 %v334, %v334
      %v339 = vpack.c.b16 %v335, %v335
      %v340 = vpack.c.b16 %v336, %v336
      %vm345 = vcmask 125952
      %346 = vst.msk [vmem:[%s201] sm:$0xf] %vm345, %v337
      %347 = vst.msk [vmem:[%s201 + $0x4] sm:$0xf] %vm345, %v338
      %348 = vst.msk [vmem:[%s201 + $0x8] sm:$0xf] %vm345, %v339
      %349 = vst.msk [vmem:[%s201 + $0xc] sm:$0xf] %vm345, %v340
      %p350 = scmp.lt.s32.totalorder %s18, 1
      %s351 = scalar_select %p350, %s18, 1
      %p352 = scmp.lt.s32.totalorder %s19, 0
      %s353 = scalar_select %p352, %s19, 0
      %s354 = smul.addr %s351, 4
      %s355 = sadd.s32 %s353, %s354
      %s356 = smul.addr %s355, 4
      %s357 = scalar_lea.vmem %s3, %s356
      // Predicated region
      $region33: #{tpu_custom_call.1} parent=31 // pred_check
        %p358 = pneg %p116
      $region34: #{tpu_custom_call.1} parent=31 // pred_check_branch
        %360 = sbr.rel (%p358) target = $region36
      $region35: #{tpu_custom_call.1} parent=31 // pred_region
        _
      $region36: #{tpu_custom_call.1} parent=31 // pred_fallthru
        _
    $region32: #{tpu_custom_call.1} parent=5 // pred_fallthru
      _
    %p361 = scmp.le.s32.totalorder 2, %s9
    // Predicated region
    $region37: #{tpu_custom_call.1} parent=5 // pred_check
      %p362 = pneg %p361
    $region38: #{tpu_custom_call.1} parent=5 // pred_check_branch
      %364 = sbr.rel (%p362) target = $region40
    $region39: #{tpu_custom_call.1} parent=5 // pred_region
      %s365 = ssub.s32 %s9, 2
      // Predicated region
      $region41: #{tpu_custom_call.1} parent=39 // pred_check
        %p366 = pneg %p122
      $region42: #{tpu_custom_call.1} parent=39 // pred_check_branch
        %368 = sbr.rel (%p366) target = $region44
      $region43: #{tpu_custom_call.1} parent=39 // pred_region
        %p369 = scmp.lt.s32.totalorder %s20, 1
        %s370 = scalar_select %p369, %s20, 1
        %p371 = scmp.lt.s32.totalorder %s21, 0
        %s372 = scalar_select %p371, %s21, 0
        %s373 = smul.addr %s370, 4
        %s374 = sadd.s32 %s372, %s373
        %s375 = smul.addr %s374, 4
        %s376 = scalar_lea.vmem %s3, %s375
      $region44: #{tpu_custom_call.1} parent=39 // pred_fallthru
        _
    $region40: #{tpu_custom_call.1} parent=5 // pred_fallthru
      _
  $region6: #{tpu_custom_call.1} parent=0 // loop_footer
    %s13 = sadd.s32 1, %s9
  $region7: #{tpu_custom_call.1} parent=0 // loop_footer_branch
    %8 = sbr.rel target = $region3
  $region8: #{tpu_custom_call.1} parent=0 // loop_exit
    _

</llo_original>
